<compile_context>
chip_gen: v6e
topology: v6e:2x2x1
jax: 0.10.0
libtpu: 0.0.40
codegen_flags: <defaults>
</compile_context>

<pallas_src>
import functools

import jax
import jax.numpy as jnp
from jax.experimental import pallas as pl
from jax.experimental.pallas import tpu as pltpu

IN_F = 9          # real input features
HID = 128         # hidden width
OUT_F = 9         # real output features
PAD_IN = 16       # padded input feature lanes (block spans full array width)
PAD_OUT = 16      # padded output lanes (block spans full array width)
MAX_TM = 2048     # largest batch tile
_TM_BUCKETS = (16, 64, 256, 1024)   # single-tile buckets for small batches


def _round_up(n, m):
    return ((n + m - 1) // m) * m


def _choose_tm(batch):
    """Pick a static batch-tile size.

    Small batches get a single tile from a fixed bucket list (bounded number of
    Mosaic compiles, multiples of 16 so bf16 vreg pairs are fully packed).
    Larger batches use big tiles (amortize ~0.35us/step grid overhead) but are
    guaranteed >= 2 grid steps so the "parallel" batch axis can shard across
    v7x's two TensorCores.  Large tiles are multiples of 128 (v5e MXU passes).
    """
    if batch <= _TM_BUCKETS[-1]:
        for tm in _TM_BUCKETS:
            if batch <= tm:
                return tm
    return 1024 if batch <= 2 * MAX_TM else MAX_TM


def tictacnet_kernel(x_ref, w1_ref, b1_ref, w2_ref, b2_ref, w3_ref, b3_ref, o_ref):
    # x:  (tm, 16)  bf16      w1: (16, 128) bf16     b1: (1, 128) f32
    # w2: (128,128) bf16      b2: (1, 128)  f32
    # w3: (128, 16) bf16      b3: (1, 16)   f32      o:  (tm, 16) bf16
    x = x_ref[...]

    h1 = jnp.dot(x, w1_ref[...], preferred_element_type=jnp.float32) + b1_ref[...]
    h1 = jnp.maximum(h1, 0.0)

    h2 = jnp.dot(h1.astype(jnp.bfloat16), w2_ref[...],
                 preferred_element_type=jnp.float32) + b2_ref[...]
    h2 = jnp.maximum(h2, 0.0)

    z = jnp.dot(h2.astype(jnp.bfloat16), w3_ref[...],
                preferred_element_type=jnp.float32) + b3_ref[...]
    # f32 sigmoid (EUP; v5e has no bf16 path), bf16 only at the store.
    o_ref[...] = jax.nn.sigmoid(z).astype(jnp.bfloat16)


def prepare_params(params):
    """One-time preprocessing: PyTorch Linear (y = x @ W.T + b) -> transposed,
    zero-padded, bf16 weights and f32 biases, ready for the kernel."""
    w1, b1, w2, b2, w3, b3 = params
    w1_p = jnp.zeros((PAD_IN, HID), jnp.bfloat16).at[:IN_F, :].set(
        w1.T.astype(jnp.bfloat16))                                    # (16, 128)
    w2_p = w2.T.astype(jnp.bfloat16)                                  # (128, 128)
    w3_p = jnp.zeros((HID, PAD_OUT), jnp.bfloat16).at[:, :OUT_F].set(
        w3.T.astype(jnp.bfloat16))                                    # (128, 16)
    b1_p = b1.reshape(1, HID).astype(jnp.float32)
    b2_p = b2.reshape(1, HID).astype(jnp.float32)
    b3_p = jnp.zeros((1, PAD_OUT), jnp.float32).at[0, :OUT_F].set(b3)
    return (w1_p, b1_p, w2_p, b2_p, w3_p, b3_p)


@functools.partial(jax.jit, static_argnames=("tm",))
def _forward(x, w1_p, b1_p, w2_p, b2_p, w3_p, b3_p, *, tm):
    B = x.shape[0]
    B_pad = _round_up(B, tm)

    # Pad features 9 -> 16 lanes and batch -> multiple of tm, in bf16
    # (tiny compared with the old 128-lane f32 pad).
    x_pad = jnp.zeros((B_pad, PAD_IN), jnp.bfloat16).at[:B, :IN_F].set(
        x.astype(jnp.bfloat16))

    out = pl.pallas_call(
        tictacnet_kernel,
        out_shape=jax.ShapeDtypeStruct((B_pad, PAD_OUT), jnp.bfloat16),
        grid_spec=pltpu.PrefetchScalarGridSpec(
            num_scalar_prefetch=0,
            grid=(B_pad // tm,),
            in_specs=[
                pl.BlockSpec((tm, PAD_IN), lambda i: (i, 0)),      # x tile
                # Constant index maps: the pipeline DMAs these once and keeps
                # them resident (block index never changes between steps).
                pl.BlockSpec((PAD_IN, HID), lambda i: (0, 0)),     # w1
                pl.BlockSpec((1, HID), lambda i: (0, 0)),          # b1
                pl.BlockSpec((HID, HID), lambda i: (0, 0)),        # w2
                pl.BlockSpec((1, HID), lambda i: (0, 0)),          # b2
                pl.BlockSpec((HID, PAD_OUT), lambda i: (0, 0)),    # w3
                pl.BlockSpec((1, PAD_OUT), lambda i: (0, 0)),      # b3
            ],
            out_specs=pl.BlockSpec((tm, PAD_OUT), lambda i: (i, 0)),
        ),
        compiler_params=pltpu.CompilerParams(
            dimension_semantics=("parallel",)),   # shards batch axis across v7x TCs
    )(x_pad, w1_p, b1_p, w2_p, b2_p, w3_p, b3_p)

    return out[:B, :OUT_F].astype(jnp.float32)


def tictacnet_forward(x, prepared_params):
    """x: (B, 9) float32.  prepared_params: output of prepare_params().
    Returns (B, 9) float32 (sigmoid outputs, bf16 precision internally)."""
    tm = _choose_tm(x.shape[0])
    return _forward(x, *prepared_params, tm=tm)


def init_params(key):
    """Deterministic init mimicking PyTorch Linear default: U(-1/sqrt(fan_in), ...)."""
    ks = jax.random.split(key, 6)

    def lin(kw, kb, out_f, in_f):
        bound = 1.0 / jnp.sqrt(in_f)
        w = jax.random.uniform(kw, (out_f, in_f), jnp.float32, -bound, bound)
        b = jax.random.uniform(kb, (out_f,), jnp.float32, -bound, bound)
        return w, b

    w1, b1 = lin(ks[0], ks[1], HID, IN_F)     # dl1: (128, 9), (128,)
    w2, b2 = lin(ks[2], ks[3], HID, HID)      # dl2: (128, 128), (128,)
    w3, b3 = lin(ks[4], ks[5], OUT_F, HID)    # output_layer: (9, 128), (9,)
    return (w1, b1, w2, b2, w3, b3)


def reference_forward(x, params):
    w1, b1, w2, b2, w3, b3 = params
    h1 = jnp.maximum(x @ w1.T + b1, 0.0)
    h2 = jnp.maximum(h1 @ w2.T + b2, 0.0)
    return jax.nn.sigmoid(h2 @ w3.T + b3)


if __name__ == "__main__":
    key = jax.random.PRNGKey(0)
    k_param, k_x = jax.random.split(key)
    params = init_params(k_param)
    prepared = prepare_params(params)          # one-time weight prep (transpose/pad/bf16)

    # Small batch (tm=16, single grid step). Board values in {-1, 0, 1}.
    batch = 2
    x = jax.random.randint(k_x, (batch, IN_F), -1, 2).astype(jnp.float32)
    y = jax.block_until_ready(tictacnet_forward(x, prepared))
    y_ref = reference_forward(x, params)
    assert y.shape == (batch, OUT_F)
    # bf16 matmul operands + bf16 output store -> loosened tolerance vs f32 ref.
    assert jnp.allclose(y, y_ref, atol=3e-2, rtol=3e-2), "mismatch vs reference"

    # Large batch: tm=1024, 2 parallel grid steps (both v7x TensorCores get work).
    xb = jax.random.randint(jax.random.PRNGKey(1), (1030, IN_F), -1, 2).astype(jnp.float32)
    yb = jax.block_until_ready(tictacnet_forward(xb, prepared))
    yb_ref = reference_forward(xb, params)
    assert yb.shape == (1030, OUT_F)
    assert jnp.allclose(yb, yb_ref, atol=3e-2, rtol=3e-2), "mismatch vs reference (large batch)"

    print("KERNEL_OK")
</pallas_src>

<mosaic_0001>
module attributes {stable_mosaic.version = 11 : i64} {
  func.func @tictacnet_kernel(%arg0: i32, %arg1: memref<16x16xbf16, #tpu.memory_space<vmem>>, %arg2: memref<16x128xbf16, #tpu.memory_space<vmem>>, %arg3: memref<1x128xf32, #tpu.memory_space<vmem>>, %arg4: memref<128x128xbf16, #tpu.memory_space<vmem>>, %arg5: memref<1x128xf32, #tpu.memory_space<vmem>>, %arg6: memref<128x16xbf16, #tpu.memory_space<vmem>>, %arg7: memref<1x16xf32, #tpu.memory_space<vmem>>, %arg8: memref<16x16xbf16, #tpu.memory_space<vmem>>) attributes {dimension_semantics = [#tpu.dimension_semantics<parallel>], iteration_bounds = array<i64: 1>, scalar_prefetch = 0 : i64, scratch_operands = 0 : i64, tpu.core_type = #tpu.core_type<tc>, window_params = [{transform_indices = @transform_0, window_bounds = array<i64: 16, 16>}, {pipeline_mode = #tpu.pipeline_mode<synchronous>, transform_indices = @transform_1, window_bounds = array<i64: 16, 128>}, {pipeline_mode = #tpu.pipeline_mode<synchronous>, transform_indices = @transform_2, window_bounds = array<i64: 1, 128>}, {pipeline_mode = #tpu.pipeline_mode<synchronous>, transform_indices = @transform_3, window_bounds = array<i64: 128, 128>}, {pipeline_mode = #tpu.pipeline_mode<synchronous>, transform_indices = @transform_4, window_bounds = array<i64: 1, 128>}, {pipeline_mode = #tpu.pipeline_mode<synchronous>, transform_indices = @transform_5, window_bounds = array<i64: 128, 16>}, {pipeline_mode = #tpu.pipeline_mode<synchronous>, transform_indices = @transform_6, window_bounds = array<i64: 1, 16>}, {transform_indices = @transform_7, window_bounds = array<i64: 16, 16>}]} {
    %c0 = arith.constant 0 : index
    %c0_0 = arith.constant 0 : index
    %0 = vector.load %arg1[%c0, %c0_0] : memref<16x16xbf16, #tpu.memory_space<vmem>>, vector<16x16xbf16>
    %c0_1 = arith.constant 0 : index
    %c0_2 = arith.constant 0 : index
    %1 = vector.load %arg2[%c0_1, %c0_2] : memref<16x128xbf16, #tpu.memory_space<vmem>>, vector<16x128xbf16>
    %cst = arith.constant dense<0.000000e+00> : vector<16x128xf32>
    %2 = tpu.matmul %0, %1, %cst {dimension_numbers = #tpu.dot_dimension_numbers<[1], [0], [0], [1], [0, 0, 1, 1], [], []>} : vector<16x16xbf16>, vector<16x128xbf16>, vector<16x128xf32> -> vector<16x128xf32>
    %c0_3 = arith.constant 0 : index
    %c0_4 = arith.constant 0 : index
    %3 = vector.load %arg3[%c0_3, %c0_4] : memref<1x128xf32, #tpu.memory_space<vmem>>, vector<1x128xf32>
    %4 = vector.broadcast %3 : vector<1x128xf32> to vector<16x128xf32>
    %5 = arith.addf %2, %4 : vector<16x128xf32>
    %cst_5 = arith.constant 0.000000e+00 : f32
    %6 = vector.broadcast %cst_5 : f32 to vector<16x128xf32>
    %7 = arith.maximumf %5, %6 : vector<16x128xf32>
    %8 = arith.truncf %7 : vector<16x128xf32> to vector<16x128xbf16>
    %c0_6 = arith.constant 0 : index
    %c0_7 = arith.constant 0 : index
    %9 = vector.load %arg4[%c0_6, %c0_7] : memref<128x128xbf16, #tpu.memory_space<vmem>>, vector<128x128xbf16>
    %cst_8 = arith.constant dense<0.000000e+00> : vector<16x128xf32>
    %10 = tpu.matmul %8, %9, %cst_8 {dimension_numbers = #tpu.dot_dimension_numbers<[1], [0], [0], [1], [0, 0, 1, 1], [], []>} : vector<16x128xbf16>, vector<128x128xbf16>, vector<16x128xf32> -> vector<16x128xf32>
    %c0_9 = arith.constant 0 : index
    %c0_10 = arith.constant 0 : index
    %11 = vector.load %arg5[%c0_9, %c0_10] : memref<1x128xf32, #tpu.memory_space<vmem>>, vector<1x128xf32>
    %12 = vector.broadcast %11 : vector<1x128xf32> to vector<16x128xf32>
    %13 = arith.addf %10, %12 : vector<16x128xf32>
    %cst_11 = arith.constant 0.000000e+00 : f32
    %14 = vector.broadcast %cst_11 : f32 to vector<16x128xf32>
    %15 = arith.maximumf %13, %14 : vector<16x128xf32>
    %16 = arith.truncf %15 : vector<16x128xf32> to vector<16x128xbf16>
    %c0_12 = arith.constant 0 : index
    %c0_13 = arith.constant 0 : index
    %17 = vector.load %arg6[%c0_12, %c0_13] : memref<128x16xbf16, #tpu.memory_space<vmem>>, vector<128x16xbf16>
    %cst_14 = arith.constant dense<0.000000e+00> : vector<16x16xf32>
    %18 = tpu.matmul %16, %17, %cst_14 {dimension_numbers = #tpu.dot_dimension_numbers<[1], [0], [0], [1], [0, 0, 1, 1], [], []>} : vector<16x128xbf16>, vector<128x16xbf16>, vector<16x16xf32> -> vector<16x16xf32>
    %c0_15 = arith.constant 0 : index
    %c0_16 = arith.constant 0 : index
    %19 = vector.load %arg7[%c0_15, %c0_16] : memref<1x16xf32, #tpu.memory_space<vmem>>, vector<1x16xf32>
    %20 = vector.broadcast %19 : vector<1x16xf32> to vector<16x16xf32>
    %21 = arith.addf %18, %20 : vector<16x16xf32>
    %22 = arith.negf %21 : vector<16x16xf32>
    %23 = math.exp %22 : vector<16x16xf32>
    %cst_17 = arith.constant 1.000000e+00 : f32
    %24 = vector.broadcast %cst_17 : f32 to vector<16x16xf32>
    %25 = arith.addf %24, %23 : vector<16x16xf32>
    %26 = arith.divf %24, %25 : vector<16x16xf32>
    %27 = arith.truncf %26 : vector<16x16xf32> to vector<16x16xbf16>
    %c0_18 = arith.constant 0 : index
    %c0_19 = arith.constant 0 : index
    %28 = vector.load %arg8[%c0_18, %c0_19] : memref<16x16xbf16, #tpu.memory_space<vmem>>, vector<16x16xbf16>
    tpu.vector_store %arg8[%c0_18, %c0_19], %27 {strides = array<i32>} : memref<16x16xbf16, #tpu.memory_space<vmem>>, vector<16x16xbf16>,
    return
  }
  func.func @transform_0(%arg0: i32) -> (i32, i32) {
    %c0_i32 = arith.constant 0 : i32
    %c0_i32_0 = arith.constant 0 : i32
    return %arg0, %c0_i32 : i32, i32
  }
  func.func @transform_1(%arg0: i32) -> (i32, i32) {
    %c0_i32 = arith.constant 0 : i32
    %c0_i32_0 = arith.constant 0 : i32
    %c0_i32_1 = arith.constant 0 : i32
    return %c0_i32, %c0_i32_0 : i32, i32
  }
  func.func @transform_2(%arg0: i32) -> (i32, i32) {
    %c0_i32 = arith.constant 0 : i32
    %c0_i32_0 = arith.constant 0 : i32
    %c0_i32_1 = arith.constant 0 : i32
    return %c0_i32, %c0_i32_0 : i32, i32
  }
  func.func @transform_3(%arg0: i32) -> (i32, i32) {
    %c0_i32 = arith.constant 0 : i32
    %c0_i32_0 = arith.constant 0 : i32
    %c0_i32_1 = arith.constant 0 : i32
    return %c0_i32, %c0_i32_0 : i32, i32
  }
  func.func @transform_4(%arg0: i32) -> (i32, i32) {
    %c0_i32 = arith.constant 0 : i32
    %c0_i32_0 = arith.constant 0 : i32
    %c0_i32_1 = arith.constant 0 : i32
    return %c0_i32, %c0_i32_0 : i32, i32
  }
  func.func @transform_5(%arg0: i32) -> (i32, i32) {
    %c0_i32 = arith.constant 0 : i32
    %c0_i32_0 = arith.constant 0 : i32
    %c0_i32_1 = arith.constant 0 : i32
    return %c0_i32, %c0_i32_0 : i32, i32
  }
  func.func @transform_6(%arg0: i32) -> (i32, i32) {
    %c0_i32 = arith.constant 0 : i32
    %c0_i32_0 = arith.constant 0 : i32
    %c0_i32_1 = arith.constant 0 : i32
    return %c0_i32, %c0_i32_0 : i32, i32
  }
  func.func @transform_7(%arg0: i32) -> (i32, i32) {
    %c0_i32 = arith.constant 0 : i32
    %c0_i32_0 = arith.constant 0 : i32
    return %arg0, %c0_i32 : i32, i32
  }
}

</mosaic_0001>

<llo_original>
// kernel: _forward.1
$region0: #{_forward.1}
  #allocation0 [shape = 'u32[]', space=smem, size = 0x4, offset = 0x4, fixed_abs, tag = 'smem constant byte address 0x4 - core index']
  #allocation1 [shape = 'u32[144,128]{1,0:T(1,128)}', space=vmem, size = 0x12000, scoped, tag = 'internal scratch']
  %s0 = inlined_call_operand.vmem [shape: bf16[16,16], index: 0, kind: input, shape index: {}]
  %s1 = inlined_call_operand.vmem [shape: bf16[16,128], index: 1, kind: input, shape index: {}]
  %s2 = inlined_call_operand.vmem [shape: f32[1,128], index: 2, kind: input, shape index: {}]
  %s3 = inlined_call_operand.vmem [shape: bf16[128,128], index: 3, kind: input, shape index: {}]
  %s4 = inlined_call_operand.vmem [shape: f32[1,128], index: 4, kind: input, shape index: {}]
  %s5 = inlined_call_operand.vmem [shape: bf16[128,16], index: 5, kind: input, shape index: {}]
  %s6 = inlined_call_operand.vmem [shape: f32[1,16], index: 6, kind: input, shape index: {}]
  %s7 = inlined_call_operand.vmem [shape: bf16[16,16], index: 7, kind: output, shape index: {}]
  %s8 = sld [smem:[#allocation0]]
  $region38: #{_forward.1} parent=0
    _
  %s10 = ssub.s32 1, %s8
  %s11 = scalar_select 0, %s10, %s8
  // Predicated region
  $region2: #{_forward.1} parent=0 // pred_check
    _
  $region3: #{_forward.1} parent=0 // pred_check_branch
    %13 = sbr.rel (0) target = $region5
  $region4: #{_forward.1} parent=0 // pred_region
    _
  $region5: #{_forward.1} parent=0 // pred_fallthru
    _
  // Predicated region
  $region6: #{_forward.1} parent=0 // pred_check
    _
  $region7: #{_forward.1} parent=0 // pred_check_branch
    %15 = sbr.rel (0) target = $region9
  $region8: #{_forward.1} parent=0 // pred_region
    _
  $region9: #{_forward.1} parent=0 // pred_fallthru
    _
  // Predicated region
  $region10: #{_forward.1} parent=0 // pred_check
    _
  $region11: #{_forward.1} parent=0 // pred_check_branch
    %17 = sbr.rel (0) target = $region13
  $region12: #{_forward.1} parent=0 // pred_region
    _
  $region13: #{_forward.1} parent=0 // pred_fallthru
    _
  // Predicated region
  $region14: #{_forward.1} parent=0 // pred_check
    _
  $region15: #{_forward.1} parent=0 // pred_check_branch
    %19 = sbr.rel (0) target = $region17
  $region16: #{_forward.1} parent=0 // pred_region
    _
  $region17: #{_forward.1} parent=0 // pred_fallthru
    _
  // Predicated region
  $region18: #{_forward.1} parent=0 // pred_check
    _
  $region19: #{_forward.1} parent=0 // pred_check_branch
    %21 = sbr.rel (0) target = $region21
  $region20: #{_forward.1} parent=0 // pred_region
    _
  $region21: #{_forward.1} parent=0 // pred_fallthru
    _
  // Predicated region
  $region22: #{_forward.1} parent=0 // pred_check
    _
  $region23: #{_forward.1} parent=0 // pred_check_branch
    %23 = sbr.rel (0) target = $region25
  $region24: #{_forward.1} parent=0 // pred_region
    _
  $region25: #{_forward.1} parent=0 // pred_fallthru
    _
  // Predicated region
  $region26: #{_forward.1} parent=0 // pred_check
    _
  $region27: #{_forward.1} parent=0 // pred_check_branch
    %25 = sbr.rel (0) target = $region29
  $region28: #{_forward.1} parent=0 // pred_region
    _
  $region29: #{_forward.1} parent=0 // pred_fallthru
    _
  %v27 = vld [vmem:[%s0] sm:$0xf]
  %v28 = vld [vmem:[%s0 + $0x4] sm:$0xf]
  %v29 = vld [vmem:[%s1] sm:$0xf]
  %v30 = vld [vmem:[%s1 + $0x4] sm:$0xf]
  %v31 = vld [vmem:[%s2] sm:$0x1]
  %v33 = vlaneseq
  %v34 = vshrl.u32 %v33, 7
  %v35 = vsub.s32 0, %v34
  %v36 = vrot.slane %v31, %v35
  %v40 = vunpack.c.l.b16 %v27
  %v41 = vunpack.c.l.b16 %v28
  %v42 = vpack.c.b16 %v41, %v40
  %v45 = vunpack.c.l.b16 %v29
  %v46 = vunpack.c.l.b16 %v30
  %v47 = vpack.c.b16 %v46, %v45
  %vm49 = vcmask 130048
  %v51 = vsel %vm49, %v42, 0
  %53 = vmatprep.subr.bf16.mxu0 0
  %54 = vmatpush1.bf16.msra.mxu0 0
  %55 = vmatprep.subr.bf16.mxu0 0
  %56 = vmatpush1.bf16.msra.mxu0 0
  %57 = vmatprep.subr.bf16.mxu0 0
  %58 = vmatpush1.bf16.msra.mxu0 0
  %59 = vmatprep.subr.bf16.mxu0 0
  %60 = vmatpush1.bf16.msra.mxu0 0
  %61 = vmatprep.subr.bf16.mxu0 0
  %62 = vmatpush1.bf16.msra.mxu0 0
  %63 = vmatprep.subr.bf16.mxu0 0
  %64 = vmatpush1.bf16.msra.mxu0 0
  %65 = vmatprep.subr.bf16.mxu0 0
  %66 = vmatpush1.bf16.msra.mxu0 0
  %67 = vmatprep.subr.bf16.mxu0 0
  %68 = vmatpush1.bf16.msra.mxu0 %v47
  %69 = vmatprep.subr.bf16.mxu0 0
  %70 = vmatpush2.bf16.msra.mxu0 0
  %71 = vmatprep.subr.bf16.mxu0 0
  %72 = vmatpush2.bf16.msra.mxu0 0
  %73 = vmatprep.subr.bf16.mxu0 0
  %74 = vmatpush2.bf16.msra.mxu0 0
  %75 = vmatprep.subr.bf16.mxu0 0
  %76 = vmatpush2.bf16.msra.mxu0 0
  %77 = vmatprep.subr.bf16.mxu0 0
  %78 = vmatpush2.bf16.msra.mxu0 0
  %79 = vmatprep.subr.bf16.mxu0 0
  %80 = vmatpush2.bf16.msra.mxu0 0
  %81 = vmatprep.subr.bf16.mxu0 0
  %82 = vmatpush2.bf16.msra.mxu0 0
  %83 = vmatprep.subr.bf16.mxu0 0
  %84 = vmatpush2.bf16.msra.mxu0 0
  %85 = vmatprep.mubr.bf16.mxu0 0
  %86 = vmatmul.mubr.bf16.gmra.mxu0 %v51
  %v87 = vpop.f32.mrf.mxu0
  %v88 = vadd.f32 %v36, %v87
  %v89 = vpop.f32.mrf.mxu0
  %v90 = vpop.f32.mrf.mxu0
  %v91 = vadd.f32 %v36, %v90
  %v92 = vpop.f32.mrf.mxu0
  %93 = vdwg.mxu0
  %v94 = vmax.f32 %v88, 0.0
  %v95 = vmax.f32 %v91, 0.0
  %v96 = vpack.c.bf16 %v95, %v94
  %v97 = vld [vmem:[%s3] sm:$0xf]
  %v98 = vld [vmem:[%s3 + $0x4] sm:$0xf]
  %v99 = vld [vmem:[%s3 + $0x8] sm:$0xf]
  %v100 = vld [vmem:[%s3 + $0xc] sm:$0xf]
  %v101 = vld [vmem:[%s3 + $0x10] sm:$0xf]
  %v102 = vld [vmem:[%s3 + $0x14] sm:$0xf]
  %v103 = vld [vmem:[%s3 + $0x18] sm:$0xf]
  %v104 = vld [vmem:[%s3 + $0x1c] sm:$0xf]
  %v105 = vld [vmem:[%s3 + $0x20] sm:$0xf]
  %v106 = vld [vmem:[%s3 + $0x24] sm:$0xf]
  %v107 = vld [vmem:[%s3 + $0x28] sm:$0xf]
  %v108 = vld [vmem:[%s3 + $0x2c] sm:$0xf]
  %v109 = vld [vmem:[%s3 + $0x30] sm:$0xf]
  %v110 = vld [vmem:[%s3 + $0x34] sm:$0xf]
  %v111 = vld [vmem:[%s3 + $0x38] sm:$0xf]
  %v112 = vld [vmem:[%s3 + $0x3c] sm:$0xf]
  %v113 = vld [vmem:[%s4] sm:$0x1]
  %v115 = vlaneseq
  %v116 = vshrl.u32 %v115, 7
  %v117 = vsub.s32 0, %v116
  %v118 = vrot.slane %v113, %v117
  %v136 = vunpack.c.l.b16 %v97
  %v137 = vunpack.c.l.b16 %v98
  %v138 = vunpack.c.l.b16 %v99
  %v139 = vunpack.c.l.b16 %v100
  %v140 = vunpack.c.l.b16 %v101
  %v141 = vunpack.c.l.b16 %v102
  %v142 = vunpack.c.l.b16 %v103
  %v143 = vunpack.c.l.b16 %v104
  %v144 = vunpack.c.l.b16 %v105
  %v145 = vunpack.c.l.b16 %v106
  %v146 = vunpack.c.l.b16 %v107
  %v147 = vunpack.c.l.b16 %v108
  %v148 = vunpack.c.l.b16 %v109
  %v149 = vunpack.c.l.b16 %v110
  %v150 = vunpack.c.l.b16 %v111
  %v151 = vunpack.c.l.b16 %v112
  %v152 = vpack.c.b16 %v137, %v136
  %v153 = vpack.c.b16 %v139, %v138
  %v154 = vpack.c.b16 %v141, %v140
  %v155 = vpack.c.b16 %v143, %v142
  %v156 = vpack.c.b16 %v145, %v144
  %v157 = vpack.c.b16 %v147, %v146
  %v158 = vpack.c.b16 %v149, %v148
  %v159 = vpack.c.b16 %v151, %v150
  %168 = vmatprep.subr.bf16.mxu0 0
  %169 = vmatpush1.bf16.msra.mxu0 %v159
  %170 = vmatprep.subr.bf16.mxu0 0
  %171 = vmatpush1.bf16.msra.mxu0 %v158
  %172 = vmatprep.subr.bf16.mxu0 0
  %173 = vmatpush1.bf16.msra.mxu0 %v157
  %174 = vmatprep.subr.bf16.mxu0 0
  %175 = vmatpush1.bf16.msra.mxu0 %v156
  %176 = vmatprep.subr.bf16.mxu0 0
  %177 = vmatpush1.bf16.msra.mxu0 %v155
  %178 = vmatprep.subr.bf16.mxu0 0
  %179 = vmatpush1.bf16.msra.mxu0 %v154
  %180 = vmatprep.subr.bf16.mxu0 0
  %181 = vmatpush1.bf16.msra.mxu0 %v153
  %182 = vmatprep.subr.bf16.mxu0 0
  %183 = vmatpush1.bf16.msra.mxu0 %v152
  %184 = vmatprep.subr.bf16.mxu0 0
  %185 = vmatpush2.bf16.msra.mxu0 0
  %186 = vmatprep.subr.bf16.mxu0 0
  %187 = vmatpush2.bf16.msra.mxu0 0
  %188 = vmatprep.subr.bf16.mxu0 0
  %189 = vmatpush2.bf16.msra.mxu0 0
  %190 = vmatprep.subr.bf16.mxu0 0
  %191 = vmatpush2.bf16.msra.mxu0 0
  %192 = vmatprep.subr.bf16.mxu0 0
  %193 = vmatpush2.bf16.msra.mxu0 0
  %194 = vmatprep.subr.bf16.mxu0 0
  %195 = vmatpush2.bf16.msra.mxu0 0
  %196 = vmatprep.subr.bf16.mxu0 0
  %197 = vmatpush2.bf16.msra.mxu0 0
  %198 = vmatprep.subr.bf16.mxu0 0
  %199 = vmatpush2.bf16.msra.mxu0 0
  %200 = vmatprep.mubr.bf16.mxu0 0
  %201 = vmatmul.mubr.bf16.gmra.mxu0 %v96
  %v202 = vpop.f32.mrf.mxu0
  %v203 = vadd.f32 %v118, %v202
  %v204 = vpop.f32.mrf.mxu0
  %v205 = vpop.f32.mrf.mxu0
  %v206 = vadd.f32 %v118, %v205
  %v207 = vpop.f32.mrf.mxu0
  %208 = vdwg.mxu0
  %v209 = vmax.f32 %v203, 0.0
  %v210 = vmax.f32 %v206, 0.0
  %v211 = vpack.c.bf16 %v210, %v209
  %v212 = vld [vmem:[%s5] sm:$0xf]
  %v213 = vld [vmem:[%s5 + $0x4] sm:$0xf]
  %v214 = vld [vmem:[%s5 + $0x8] sm:$0xf]
  %v215 = vld [vmem:[%s5 + $0xc] sm:$0xf]
  %v216 = vld [vmem:[%s5 + $0x10] sm:$0xf]
  %v217 = vld [vmem:[%s5 + $0x14] sm:$0xf]
  %v218 = vld [vmem:[%s5 + $0x18] sm:$0xf]
  %v219 = vld [vmem:[%s5 + $0x1c] sm:$0xf]
  %v220 = vld [vmem:[%s5 + $0x20] sm:$0xf]
  %v221 = vld [vmem:[%s5 + $0x24] sm:$0xf]
  %v222 = vld [vmem:[%s5 + $0x28] sm:$0xf]
  %v223 = vld [vmem:[%s5 + $0x2c] sm:$0xf]
  %v224 = vld [vmem:[%s5 + $0x30] sm:$0xf]
  %v225 = vld [vmem:[%s5 + $0x34] sm:$0xf]
  %v226 = vld [vmem:[%s5 + $0x38] sm:$0xf]
  %v227 = vld [vmem:[%s5 + $0x3c] sm:$0xf]
  %v228 = vld [vmem:[%s6] sm:$0x1]
  %v230 = vlaneseq
  %v231 = vshrl.u32 %v230, 7
  %v232 = vsub.s32 0, %v231
  %v233 = vrot.slane %v228, %v232
  %v251 = vunpack.c.l.b16 %v212
  %v252 = vunpack.c.l.b16 %v213
  %v253 = vunpack.c.l.b16 %v214
  %v254 = vunpack.c.l.b16 %v215
  %v255 = vunpack.c.l.b16 %v216
  %v256 = vunpack.c.l.b16 %v217
  %v257 = vunpack.c.l.b16 %v218
  %v258 = vunpack.c.l.b16 %v219
  %v259 = vunpack.c.l.b16 %v220
  %v260 = vunpack.c.l.b16 %v221
  %v261 = vunpack.c.l.b16 %v222
  %v262 = vunpack.c.l.b16 %v223
  %v263 = vunpack.c.l.b16 %v224
  %v264 = vunpack.c.l.b16 %v225
  %v265 = vunpack.c.l.b16 %v226
  %v266 = vunpack.c.l.b16 %v227
  %v267 = vpack.c.b16 %v252, %v251
  %v268 = vpack.c.b16 %v254, %v253
  %v269 = vpack.c.b16 %v256, %v255
  %v270 = vpack.c.b16 %v258, %v257
  %v271 = vpack.c.b16 %v260, %v259
  %v272 = vpack.c.b16 %v262, %v261
  %v273 = vpack.c.b16 %v264, %v263
  %v274 = vpack.c.b16 %v266, %v265
  %283 = vmatprep.subr.bf16.mxu0 0
  %284 = vmatpush1.bf16.msra.mxu0 %v274
  %285 = vmatprep.subr.bf16.mxu0 0
  %286 = vmatpush1.bf16.msra.mxu0 %v273
  %287 = vmatprep.subr.bf16.mxu0 0
  %288 = vmatpush1.bf16.msra.mxu0 %v272
  %289 = vmatprep.subr.bf16.mxu0 0
  %290 = vmatpush1.bf16.msra.mxu0 %v271
  %291 = vmatprep.subr.bf16.mxu0 0
  %292 = vmatpush1.bf16.msra.mxu0 %v270
  %293 = vmatprep.subr.bf16.mxu0 0
  %294 = vmatpush1.bf16.msra.mxu0 %v269
  %295 = vmatprep.subr.bf16.mxu0 0
  %296 = vmatpush1.bf16.msra.mxu0 %v268
  %297 = vmatprep.subr.bf16.mxu0 0
  %298 = vmatpush1.bf16.msra.mxu0 %v267
  %299 = vmatprep.subr.bf16.mxu0 0
  %300 = vmatpush2.bf16.msra.mxu0 0
  %301 = vmatprep.subr.bf16.mxu0 0
  %302 = vmatpush2.bf16.msra.mxu0 0
  %303 = vmatprep.subr.bf16.mxu0 0
  %304 = vmatpush2.bf16.msra.mxu0 0
  %305 = vmatprep.subr.bf16.mxu0 0
  %306 = vmatpush2.bf16.msra.mxu0 0
  %307 = vmatprep.subr.bf16.mxu0 0
  %308 = vmatpush2.bf16.msra.mxu0 0
  %309 = vmatprep.subr.bf16.mxu0 0
  %310 = vmatpush2.bf16.msra.mxu0 0
  %311 = vmatprep.subr.bf16.mxu0 0
  %312 = vmatpush2.bf16.msra.mxu0 0
  %313 = vmatprep.subr.bf16.mxu0 0
  %314 = vmatpush2.bf16.msra.mxu0 0
  %315 = vmatprep.mubr.bf16.mxu0 0
  %316 = vmatmul.mubr.bf16.gmra.mxu0 %v211
  %v317 = vpop.f32.mrf.mxu0
  %v318 = vadd.f32 %v233, %v317
  %v319 = vpop.f32.mrf.mxu0
  %v320 = vpop.f32.mrf.mxu0
  %v321 = vadd.f32 %v233, %v320
  %v322 = vpop.f32.mrf.mxu0
  %323 = vdwg.mxu0
  %v324 = vxor.u32 %v318, 2147483648
  %v325 = vxor.u32 %v321, 2147483648
  %v326 = vmul.f32 %v324, 1.442695
  %v327 = vpow.pop %v326
  %v328 = vmul.f32 %v325, 1.442695
  %v329 = vpow.pop %v328
  %v330 = vadd.f32 %v327, 1.0
  %v331 = vadd.f32 %v329, 1.0
  %v332 = vrcp.pop %v330
  %v333 = vmul.f32 1.0, %v332
  %v334 = vrcp.pop %v331
  %v335 = vmul.f32 1.0, %v334
  %v336 = vpack.c.bf16 %v335, %v333
  %v338 = vunpack.c.l.b16 %v336
  %v339 = vunpack.c.h.b16 %v336
  %v340 = vpack.c.b16 %v338, %v338
  %v341 = vpack.c.b16 %v339, %v339
  %vm344 = vcmask 125952
  %345 = vst.msk [vmem:[%s7] sm:$0xf] %vm344, %v340
  %346 = vst.msk [vmem:[%s7 + $0x4] sm:$0xf] %vm344, %v341
  // Predicated region
  $region30: #{_forward.1} parent=0 // pred_check
    _
  $region31: #{_forward.1} parent=0 // pred_check_branch
    %348 = sbr.rel (0) target = $region33
  $region32: #{_forward.1} parent=0 // pred_region
    _
  $region33: #{_forward.1} parent=0 // pred_fallthru
    _
  // Predicated region
  $region34: #{_forward.1} parent=0 // pred_check
    _
  $region35: #{_forward.1} parent=0 // pred_check_branch
    %350 = sbr.rel (0) target = $region37
  $region36: #{_forward.1} parent=0 // pred_region
    _
  $region37: #{_forward.1} parent=0 // pred_fallthru
    _

</llo_original>
